<compile_context>
chip_gen: v7x
topology: tpu7x:2x2x1
jax: 0.10.0
libtpu: 0.0.40
codegen_flags: <defaults>
</compile_context>

<pallas_src>
import jax
import jax.numpy as jnp
import numpy as np
from jax.experimental import pallas as pl
from jax.experimental.pallas import tpu as pltpu


def _attgate3_kernel(x_ref, y_ref, w1x_ref, w1y_ref, bnb_ref,
                     w2x_ref, w2y_ref, o_ref):
    # x_ref / y_ref / o_ref: (Bt*C, HW); rows are (batch, channel) pairs of Bt
    # whole images, spatial axis lane-dense.

    # Global-average-pool sums straight off the refs with f32 accumulation --
    # no full-block f32 copy is kept live across the kernel.
    gx = jnp.sum(x_ref[...], axis=-1, keepdims=True, dtype=jnp.float32)   # (R, 1)
    gy = jnp.sum(y_ref[...], axis=-1, keepdims=True, dtype=jnp.float32)   # (R, 1)

    # fc1 for all Bt images at once: block-diagonal (kron) weights preserve the
    # row (batch-major, channel-minor) ordering, so no in-kernel reshape or
    # transpose is needed.  BN scale and 1/HW are pre-folded into the weights.
    h = (jnp.dot(w1x_ref[...], gx, preferred_element_type=jnp.float32)
         + jnp.dot(w1y_ref[...], gy, preferred_element_type=jnp.float32)
         + bnb_ref[...])                                                  # (Bt*d, 1)
    h = jnp.maximum(h, 0.0)

    # fc2 split into the two branch heads (block-diagonal over the batch tile).
    zx = jnp.dot(w2x_ref[...], h, preferred_element_type=jnp.float32)     # (R, 1)
    zy = jnp.dot(w2y_ref[...], h, preferred_element_type=jnp.float32)     # (R, 1)

    # Two-way softmax per (batch, channel) row.
    m = jnp.maximum(zx, zy)
    ex = jnp.exp(zx - m)
    ey = jnp.exp(zy - m)
    inv = 1.0 / (ex + ey)      # exact reciprocal: approx would exceed 2e-5 tol
    a_x = ex * inv
    a_y = ey * inv

    # Gated combine: re-read the refs here (upcast only at the point of use) so
    # no full-block f32 copies were live across the FC/softmax phase; the (R,1)
    # gates broadcast along the lane (spatial) axis.
    o_ref[...] = (x_ref[...].astype(jnp.float32) * a_x
                  + y_ref[...].astype(jnp.float32) * a_y).astype(o_ref.dtype)


def _choose_batch_tile(B, C, HW, itemsize, d):
    """Pick Bt (batch elements per grid step) for the (B*C, HW) blocked layout.

    Constraints / preferences:
      (a) Bt divides B;
      (b) Bt*C is a multiple of the dtype's sublane packing (dense vregs and a
          legal BlockSpec), or the block spans the whole array;
      (c) streamed block <= ~2 MiB per array (=> ~12 MiB double-buffered for
          x/y/out: safe on v5e/v6e/v7x VMEM budgets);
      (d) the block-diagonal FC weights stay tiny;
      (e) keep >=2 grid steps when it doesn't conflict with (b)-(d), so v7x's
          two TensorCores both get work.
    """
    sub = {1: 32, 2: 16}.get(itemsize, 8)
    io_budget = 2 * 1024 * 1024          # per streamed array per block
    wt_budget = 2 * 1024 * 1024          # block-diagonal weight cap

    divisors = [t for t in range(1, B + 1) if B % t == 0]
    legal = [t for t in divisors if t == B or (t * C) % sub == 0]

    def fits(t):
        return (t * C * HW * itemsize <= io_budget
                and 4 * (t * d) * (t * C) * 4 <= wt_budget)

    fitting = [t for t in legal if fits(t)] or [min(legal)]
    # TODO(synk): when even the smallest legal block blows the budget (very
    #             large C*HW), switch to the two-phase spatially tiled path.
    dense = [t for t in fitting if (t * C) % sub == 0] or fitting
    multi = [t for t in dense if B // t >= 2] or dense
    return max(multi)


def attgate3_forward(x_nchw, y_nchw, params):
    B, C, H, W = x_nchw.shape
    HW = H * W
    d = params["w1"].shape[0]
    itemsize = jnp.dtype(x_nchw.dtype).itemsize

    Bt = _choose_batch_tile(B, C, HW, itemsize, d)
    R = Bt * C                      # rows per block (whole images only)

    # Free reshapes (no data movement): native NCHW layout with batch*channel
    # on sublanes and the contiguous spatial axis on lanes.
    x2d = x_nchw.reshape(B * C, HW)
    y2d = y_nchw.reshape(B * C, HW)

    # Fold BatchNorm2d (eval mode) and the GAP's 1/HW into fc1's weights; only
    # the BN bias column survives into the kernel.
    eps = 1e-5
    f32 = jnp.float32
    bn_scale = (params["bn_gamma"].astype(f32)
                / jnp.sqrt(params["bn_var"].astype(f32) + eps))
    bn_bias = params["bn_beta"].astype(f32) - params["bn_mean"].astype(f32) * bn_scale
    w1 = params["w1"].astype(f32) * (bn_scale[:, None] / HW)
    w2 = params["w2"].astype(f32)

    # Block-diagonal ("kron") weights batch the tiny FCs over the Bt images of
    # a block while staying in the (row, 1)-column layout of the pooled sums.
    eye = jnp.eye(Bt, dtype=f32)
    w1x = jnp.kron(eye, w1[:, :C])                      # (Bt*d, Bt*C) on GAP(x)
    w1y = jnp.kron(eye, w1[:, C:])                      # (Bt*d, Bt*C) on GAP(y)
    bnb = jnp.tile(bn_bias.reshape(d, 1), (Bt, 1))      # (Bt*d, 1)
    w2x = jnp.kron(eye, w2[:C, :])                      # (Bt*C, Bt*d) x-branch
    w2y = jnp.kron(eye, w2[C:, :])                      # (Bt*C, Bt*d) y-branch

    img_spec = pl.BlockSpec((R, HW), lambda i: (i, 0))

    def full(arr):
        return pl.BlockSpec(arr.shape, lambda i: (0, 0))

    # Generation-safe scoped-VMEM request: x/y/out double-buffered + weights.
    block_bytes = R * HW * itemsize
    wt_bytes = 4 * (Bt * d) * (Bt * C) * 4 + (Bt * d) * 4
    resident = 3 * 2 * block_bytes + wt_bytes
    vmem_limit = int(min(56 * 2**20, max(32 * 2**20, 2 * resident)))

    out = pl.pallas_call(
        _attgate3_kernel,
        out_shape=jax.ShapeDtypeStruct((B * C, HW), x_nchw.dtype),
        grid=(B // Bt,),
        in_specs=[img_spec, img_spec,
                  full(w1x), full(w1y), full(bnb), full(w2x), full(w2y)],
        out_specs=img_spec,
        compiler_params=pltpu.CompilerParams(
            dimension_semantics=("parallel",),
            vmem_limit_bytes=vmem_limit),
    )(x2d, y2d, w1x, w1y, bnb, w2x, w2y)

    return out.reshape(B, C, H, W)


def attgate3_reference(x, y, params):
    """Pure-JAX reference mirroring the PyTorch AttGate3 forward (eval-mode BN)."""
    B, C, H, W = x.shape
    ux = x.mean(axis=(2, 3))
    uy = y.mean(axis=(2, 3))
    u = jnp.concatenate([ux, uy], axis=1)                 # (B, 2C)
    z = u @ params["w1"].T                                # Conv1x1(2C->d), no bias
    eps = 1e-5
    z = (z - params["bn_mean"]) / jnp.sqrt(params["bn_var"] + eps) \
        * params["bn_gamma"] + params["bn_beta"]
    z = jnp.maximum(z, 0.0)
    z2 = z @ params["w2"].T                               # Conv1x1(d->2C), no bias
    att = jax.nn.softmax(z2.reshape(B, 2, C), axis=1)
    a_x, a_y = att[:, 0], att[:, 1]
    return x * a_x[:, :, None, None] + y * a_y[:, :, None, None]


if __name__ == "__main__":
    B, C, H, W = 2, 4, 16, 16
    r = 4
    d = max(int(C * 2 / r), 32)   # AttGate3: d = max(in_ch*2/r, 32) = 32

    key = jax.random.PRNGKey(0)
    ks = jax.random.split(key, 8)
    x = jax.random.normal(ks[0], (B, C, H, W), jnp.float32)
    y = jax.random.normal(ks[1], (B, C, H, W), jnp.float32)

    params = dict(
        # fc1: Conv2d(2C, d, 1, bias=False).weight squeezed to (d, 2C)
        w1=jax.random.normal(ks[2], (d, 2 * C), jnp.float32) * 0.2,
        # BatchNorm2d(d) running stats / affine params (eval mode)
        bn_gamma=1.0 + 0.1 * jax.random.normal(ks[3], (d,), jnp.float32),
        bn_beta=0.1 * jax.random.normal(ks[4], (d,), jnp.float32),
        bn_mean=0.1 * jax.random.normal(ks[5], (d,), jnp.float32),
        bn_var=jnp.abs(jax.random.normal(ks[6], (d,), jnp.float32)) + 0.5,
        # fc2: Conv2d(d, 2C, 1, bias=False).weight squeezed to (2C, d)
        w2=jax.random.normal(ks[7], (2 * C, d), jnp.float32) * 0.2,
    )

    out = attgate3_forward(x, y, params)
    out = jax.block_until_ready(out)

    ref = attgate3_reference(x, y, params)
    np.testing.assert_allclose(np.asarray(out), np.asarray(ref), rtol=2e-5, atol=2e-5)

    print("KERNEL_OK")
</pallas_src>

<mosaic_0001>
module attributes {stable_mosaic.version = 11 : i64} {
  func.func @_attgate3_kernel(%arg0: i32, %arg1: memref<8x256xf32, #tpu.memory_space<vmem>>, %arg2: memref<8x256xf32, #tpu.memory_space<vmem>>, %arg3: memref<64x8xf32, #tpu.memory_space<vmem>>, %arg4: memref<64x8xf32, #tpu.memory_space<vmem>>, %arg5: memref<64x1xf32, #tpu.memory_space<vmem>>, %arg6: memref<8x64xf32, #tpu.memory_space<vmem>>, %arg7: memref<8x64xf32, #tpu.memory_space<vmem>>, %arg8: memref<8x256xf32, #tpu.memory_space<vmem>>) attributes {dimension_semantics = [#tpu.dimension_semantics<parallel>], iteration_bounds = array<i64: 1>, scalar_prefetch = 0 : i64, scratch_operands = 0 : i64, tpu.core_type = #tpu.core_type<tc>, window_params = [{transform_indices = @transform_0, window_bounds = array<i64: 8, 256>}, {transform_indices = @transform_1, window_bounds = array<i64: 8, 256>}, {pipeline_mode = #tpu.pipeline_mode<synchronous>, transform_indices = @transform_2, window_bounds = array<i64: 64, 8>}, {pipeline_mode = #tpu.pipeline_mode<synchronous>, transform_indices = @transform_3, window_bounds = array<i64: 64, 8>}, {pipeline_mode = #tpu.pipeline_mode<synchronous>, transform_indices = @transform_4, window_bounds = array<i64: 64, 1>}, {pipeline_mode = #tpu.pipeline_mode<synchronous>, transform_indices = @transform_5, window_bounds = array<i64: 8, 64>}, {pipeline_mode = #tpu.pipeline_mode<synchronous>, transform_indices = @transform_6, window_bounds = array<i64: 8, 64>}, {transform_indices = @transform_7, window_bounds = array<i64: 8, 256>}]} {
    %c0 = arith.constant 0 : index
    %c0_0 = arith.constant 0 : index
    %0 = vector.load %arg1[%c0, %c0_0] : memref<8x256xf32, #tpu.memory_space<vmem>>, vector<8x256xf32>
    %cst = arith.constant dense<0.000000e+00> : vector<8xf32>
    %1 = vector.multi_reduction <add>, %0, %cst [1] : vector<8x256xf32> to vector<8xf32>
    %2 = vector.shape_cast %1 : vector<8xf32> to vector<8x1xf32>
    %c0_1 = arith.constant 0 : index
    %c0_2 = arith.constant 0 : index
    %3 = vector.load %arg2[%c0_1, %c0_2] : memref<8x256xf32, #tpu.memory_space<vmem>>, vector<8x256xf32>
    %cst_3 = arith.constant dense<0.000000e+00> : vector<8xf32>
    %4 = vector.multi_reduction <add>, %3, %cst_3 [1] : vector<8x256xf32> to vector<8xf32>
    %5 = vector.shape_cast %4 : vector<8xf32> to vector<8x1xf32>
    %c0_4 = arith.constant 0 : index
    %c0_5 = arith.constant 0 : index
    %6 = vector.load %arg3[%c0_4, %c0_5] : memref<64x8xf32, #tpu.memory_space<vmem>>, vector<64x8xf32>
    %cst_6 = arith.constant dense<0.000000e+00> : vector<64x1xf32>
    %7 = tpu.matmul %6, %2, %cst_6 {dimension_numbers = #tpu.dot_dimension_numbers<[1], [0], [0], [1], [0, 0, 1, 1], [], []>} : vector<64x8xf32>, vector<8x1xf32>, vector<64x1xf32> -> vector<64x1xf32>
    %c0_7 = arith.constant 0 : index
    %c0_8 = arith.constant 0 : index
    %8 = vector.load %arg4[%c0_7, %c0_8] : memref<64x8xf32, #tpu.memory_space<vmem>>, vector<64x8xf32>
    %cst_9 = arith.constant dense<0.000000e+00> : vector<64x1xf32>
    %9 = tpu.matmul %8, %5, %cst_9 {dimension_numbers = #tpu.dot_dimension_numbers<[1], [0], [0], [1], [0, 0, 1, 1], [], []>} : vector<64x8xf32>, vector<8x1xf32>, vector<64x1xf32> -> vector<64x1xf32>
    %10 = arith.addf %7, %9 : vector<64x1xf32>
    %c0_10 = arith.constant 0 : index
    %c0_11 = arith.constant 0 : index
    %11 = vector.load %arg5[%c0_10, %c0_11] : memref<64x1xf32, #tpu.memory_space<vmem>>, vector<64x1xf32>
    %12 = arith.addf %10, %11 : vector<64x1xf32>
    %cst_12 = arith.constant 0.000000e+00 : f32
    %13 = vector.broadcast %cst_12 : f32 to vector<64x1xf32>
    %14 = arith.maximumf %12, %13 : vector<64x1xf32>
    %c0_13 = arith.constant 0 : index
    %c0_14 = arith.constant 0 : index
    %15 = vector.load %arg6[%c0_13, %c0_14] : memref<8x64xf32, #tpu.memory_space<vmem>>, vector<8x64xf32>
    %cst_15 = arith.constant dense<0.000000e+00> : vector<8x1xf32>
    %16 = tpu.matmul %15, %14, %cst_15 {dimension_numbers = #tpu.dot_dimension_numbers<[1], [0], [0], [1], [0, 0, 1, 1], [], []>} : vector<8x64xf32>, vector<64x1xf32>, vector<8x1xf32> -> vector<8x1xf32>
    %c0_16 = arith.constant 0 : index
    %c0_17 = arith.constant 0 : index
    %17 = vector.load %arg7[%c0_16, %c0_17] : memref<8x64xf32, #tpu.memory_space<vmem>>, vector<8x64xf32>
    %cst_18 = arith.constant dense<0.000000e+00> : vector<8x1xf32>
    %18 = tpu.matmul %17, %14, %cst_18 {dimension_numbers = #tpu.dot_dimension_numbers<[1], [0], [0], [1], [0, 0, 1, 1], [], []>} : vector<8x64xf32>, vector<64x1xf32>, vector<8x1xf32> -> vector<8x1xf32>
    %19 = arith.maximumf %16, %18 : vector<8x1xf32>
    %20 = arith.subf %16, %19 : vector<8x1xf32>
    %21 = math.exp %20 : vector<8x1xf32>
    %22 = arith.subf %18, %19 : vector<8x1xf32>
    %23 = math.exp %22 : vector<8x1xf32>
    %24 = arith.addf %21, %23 : vector<8x1xf32>
    %cst_19 = arith.constant 1.000000e+00 : f32
    %25 = vector.broadcast %cst_19 : f32 to vector<8x1xf32>
    %26 = arith.divf %25, %24 : vector<8x1xf32>
    %27 = arith.mulf %21, %26 : vector<8x1xf32>
    %28 = arith.mulf %23, %26 : vector<8x1xf32>
    %c0_20 = arith.constant 0 : index
    %c0_21 = arith.constant 0 : index
    %29 = vector.load %arg1[%c0_20, %c0_21] : memref<8x256xf32, #tpu.memory_space<vmem>>, vector<8x256xf32>
    %30 = vector.broadcast %27 : vector<8x1xf32> to vector<8x256xf32>
    %31 = arith.mulf %29, %30 : vector<8x256xf32>
    %c0_22 = arith.constant 0 : index
    %c0_23 = arith.constant 0 : index
    %32 = vector.load %arg2[%c0_22, %c0_23] : memref<8x256xf32, #tpu.memory_space<vmem>>, vector<8x256xf32>
    %33 = vector.broadcast %28 : vector<8x1xf32> to vector<8x256xf32>
    %34 = arith.mulf %32, %33 : vector<8x256xf32>
    %35 = arith.addf %31, %34 : vector<8x256xf32>
    %c0_24 = arith.constant 0 : index
    %c0_25 = arith.constant 0 : index
    %36 = vector.load %arg8[%c0_24, %c0_25] : memref<8x256xf32, #tpu.memory_space<vmem>>, vector<8x256xf32>
    tpu.vector_store %arg8[%c0_24, %c0_25], %35 {strides = array<i32>} : memref<8x256xf32, #tpu.memory_space<vmem>>, vector<8x256xf32>,
    return
  }
  func.func @transform_0(%arg0: i32) -> (i32, i32) {
    %c0_i32 = arith.constant 0 : i32
    %c0_i32_0 = arith.constant 0 : i32
    return %arg0, %c0_i32 : i32, i32
  }
  func.func @transform_1(%arg0: i32) -> (i32, i32) {
    %c0_i32 = arith.constant 0 : i32
    %c0_i32_0 = arith.constant 0 : i32
    return %arg0, %c0_i32 : i32, i32
  }
  func.func @transform_2(%arg0: i32) -> (i32, i32) {
    %c0_i32 = arith.constant 0 : i32
    %c0_i32_0 = arith.constant 0 : i32
    %c0_i32_1 = arith.constant 0 : i32
    return %c0_i32, %c0_i32_0 : i32, i32
  }
  func.func @transform_3(%arg0: i32) -> (i32, i32) {
    %c0_i32 = arith.constant 0 : i32
    %c0_i32_0 = arith.constant 0 : i32
    %c0_i32_1 = arith.constant 0 : i32
    return %c0_i32, %c0_i32_0 : i32, i32
  }
  func.func @transform_4(%arg0: i32) -> (i32, i32) {
    %c0_i32 = arith.constant 0 : i32
    %c0_i32_0 = arith.constant 0 : i32
    %c0_i32_1 = arith.constant 0 : i32
    return %c0_i32, %c0_i32_0 : i32, i32
  }
  func.func @transform_5(%arg0: i32) -> (i32, i32) {
    %c0_i32 = arith.constant 0 : i32
    %c0_i32_0 = arith.constant 0 : i32
    %c0_i32_1 = arith.constant 0 : i32
    return %c0_i32, %c0_i32_0 : i32, i32
  }
  func.func @transform_6(%arg0: i32) -> (i32, i32) {
    %c0_i32 = arith.constant 0 : i32
    %c0_i32_0 = arith.constant 0 : i32
    %c0_i32_1 = arith.constant 0 : i32
    return %c0_i32, %c0_i32_0 : i32, i32
  }
  func.func @transform_7(%arg0: i32) -> (i32, i32) {
    %c0_i32 = arith.constant 0 : i32
    %c0_i32_0 = arith.constant 0 : i32
    return %arg0, %c0_i32 : i32, i32
  }
}

</mosaic_0001>

<llo_original>
// kernel: tpu_custom_call.1
$region0: #{tpu_custom_call.1}
  #allocation0 [shape = 'u32[]', space=smem, size = 0x4, offset = 0x4, fixed_abs, tag = 'smem constant byte address 0x4 - core index']
  #allocation1 [shape = 'u32[144,128]{1,0:T(1,128)}', space=vmem, size = 0x12000, scoped, tag = 'internal scratch']
  %s0 = inlined_call_operand.vmem [shape: f32[8,256], index: 0, kind: input, shape index: {}]
  %s1 = inlined_call_operand.vmem [shape: f32[8,256], index: 1, kind: input, shape index: {}]
  %s2 = inlined_call_operand.vmem [shape: f32[64,8], index: 2, kind: input, shape index: {}]
  %s3 = inlined_call_operand.vmem [shape: f32[64,8], index: 3, kind: input, shape index: {}]
  %s4 = inlined_call_operand.vmem [shape: f32[64,1], index: 4, kind: input, shape index: {}]
  %s5 = inlined_call_operand.vmem [shape: f32[8,64], index: 5, kind: input, shape index: {}]
  %s6 = inlined_call_operand.vmem [shape: f32[8,64], index: 6, kind: input, shape index: {}]
  %s7 = inlined_call_operand.hbm [shape: f32[8,256], index: 7, kind: output, shape index: {}]
  %s8 = sld [smem:[#allocation0]]
  $region38: #{tpu_custom_call.1} parent=0
    _
  %s10 = ssub.s32 1, %s8
  %s11 = scalar_select 0, %s10, %s8
  $region1: #{tpu_custom_call.1} parent=0
    #allocation2 [shape = 'u8[8192]{0}', space=vmem, size = 0x2000, scoped, tag = 'output window, operand 0, single buffered']
    #allocation3 [shape = 's32[1]{0}', space=sflag, size = 0x4, scoped, tag = 'scoped memory for tpu_custom_call.1']
    %12 = vsyncpa [#allocation3], 0
    // Predicated region
    $region2: #{tpu_custom_call.1} parent=1 // pred_check
      _
    $region3: #{tpu_custom_call.1} parent=1 // pred_check_branch
      %14 = sbr.rel (0) target = $region5
    $region4: #{tpu_custom_call.1} parent=1 // pred_region
      _
    $region5: #{tpu_custom_call.1} parent=1 // pred_fallthru
      _
    // Predicated region
    $region6: #{tpu_custom_call.1} parent=1 // pred_check
      _
    $region7: #{tpu_custom_call.1} parent=1 // pred_check_branch
      %16 = sbr.rel (0) target = $region9
    $region8: #{tpu_custom_call.1} parent=1 // pred_region
      _
    $region9: #{tpu_custom_call.1} parent=1 // pred_fallthru
      _
    // Predicated region
    $region10: #{tpu_custom_call.1} parent=1 // pred_check
      _
    $region11: #{tpu_custom_call.1} parent=1 // pred_check_branch
      %18 = sbr.rel (0) target = $region13
    $region12: #{tpu_custom_call.1} parent=1 // pred_region
      _
    $region13: #{tpu_custom_call.1} parent=1 // pred_fallthru
      _
    // Predicated region
    $region14: #{tpu_custom_call.1} parent=1 // pred_check
      _
    $region15: #{tpu_custom_call.1} parent=1 // pred_check_branch
      %20 = sbr.rel (0) target = $region17
    $region16: #{tpu_custom_call.1} parent=1 // pred_region
      _
    $region17: #{tpu_custom_call.1} parent=1 // pred_fallthru
      _
    // Predicated region
    $region18: #{tpu_custom_call.1} parent=1 // pred_check
      _
    $region19: #{tpu_custom_call.1} parent=1 // pred_check_branch
      %22 = sbr.rel (0) target = $region21
    $region20: #{tpu_custom_call.1} parent=1 // pred_region
      _
    $region21: #{tpu_custom_call.1} parent=1 // pred_fallthru
      _
    // Predicated region
    $region22: #{tpu_custom_call.1} parent=1 // pred_check
      _
    $region23: #{tpu_custom_call.1} parent=1 // pred_check_branch
      %24 = sbr.rel (0) target = $region25
    $region24: #{tpu_custom_call.1} parent=1 // pred_region
      _
    $region25: #{tpu_custom_call.1} parent=1 // pred_fallthru
      _
    // Predicated region
    $region26: #{tpu_custom_call.1} parent=1 // pred_check
      _
    $region27: #{tpu_custom_call.1} parent=1 // pred_check_branch
      %26 = sbr.rel (0) target = $region29
    $region28: #{tpu_custom_call.1} parent=1 // pred_region
      _
    $region29: #{tpu_custom_call.1} parent=1 // pred_fallthru
      _
    %v27 = vld [vmem:[%s0] sm:$0xff]
    %v28 = vld [vmem:[%s0 + $0x8] sm:$0xff]
    %v29 = vadd.f32 %v27, %v28
    %30 = vadd.xlane.f32.xlu0 %v29
    %v31 = vpop.xlane.xlu0 %30
    %v32 = vld [vmem:[%s1] sm:$0xff]
    %v33 = vld [vmem:[%s1 + $0x8] sm:$0xff]
    %v34 = vadd.f32 %v32, %v33
    %35 = vadd.xlane.f32.xlu0 %v34
    %v36 = vpop.xlane.xlu0 %35
    %v37 = vld [vmem:[%s2] sm:$0xff]
    %v38 = vld [vmem:[%s2 + $0x8] sm:$0xff]
    %v39 = vld [vmem:[%s2 + $0x10] sm:$0xff]
    %v40 = vld [vmem:[%s2 + $0x18] sm:$0xff]
    %v41 = vld [vmem:[%s2 + $0x20] sm:$0xff]
    %v42 = vld [vmem:[%s2 + $0x28] sm:$0xff]
    %v43 = vld [vmem:[%s2 + $0x30] sm:$0xff]
    %v44 = vld [vmem:[%s2 + $0x38] sm:$0xff]
    %v45 = vld [vmem:[%s3] sm:$0xff]
    %v46 = vld [vmem:[%s3 + $0x8] sm:$0xff]
    %v47 = vld [vmem:[%s3 + $0x10] sm:$0xff]
    %v48 = vld [vmem:[%s3 + $0x18] sm:$0xff]
    %v49 = vld [vmem:[%s3 + $0x20] sm:$0xff]
    %v50 = vld [vmem:[%s3 + $0x28] sm:$0xff]
    %v51 = vld [vmem:[%s3 + $0x30] sm:$0xff]
    %v52 = vld [vmem:[%s3 + $0x38] sm:$0xff]
    %vm53 = vcmask 64512
    %v55 = vsel %vm53, %v45, 0
    %v58 = vsel %vm53, %v46, 0
    %v61 = vsel %vm53, %v47, 0
    %v64 = vsel %vm53, %v48, 0
    %v67 = vsel %vm53, %v49, 0
    %v70 = vsel %vm53, %v50, 0
    %v73 = vsel %vm53, %v51, 0
    %v76 = vsel %vm53, %v52, 0
    %78 = vmatprep.subr.mxu0 0.0
    %79 = vmatpush1.msra.mxu0 %v36
    %80 = vmatprep.subr.mxu0 0.0
    %81 = vmatpush1.msra.mxu0 0.0
    %82 = vmatprep.subr.mxu0 0.0
    %83 = vmatpush1.msra.mxu0 0.0
    %84 = vmatprep.subr.mxu0 0.0
    %85 = vmatpush1.msra.mxu0 0.0
    %86 = vmatprep.subr.mxu0 0.0
    %87 = vmatpush1.msra.mxu0 0.0
    %88 = vmatprep.subr.mxu0 0.0
    %89 = vmatpush1.msra.mxu0 0.0
    %90 = vmatprep.subr.mxu0 0.0
    %91 = vmatpush1.msra.mxu0 0.0
    %92 = vmatprep.subr.mxu0 0.0
    %93 = vmatpush1.msra.mxu0 0.0
    %94 = vmatprep.subr.mxu0 0.0
    %95 = vmatpush1.msra.mxu0 0.0
    %96 = vmatprep.subr.mxu0 0.0
    %97 = vmatpush1.msra.mxu0 0.0
    %98 = vmatprep.subr.mxu0 0.0
    %99 = vmatpush1.msra.mxu0 0.0
    %100 = vmatprep.subr.mxu0 0.0
    %101 = vmatpush1.msra.mxu0 0.0
    %102 = vmatprep.subr.mxu0 0.0
    %103 = vmatpush1.msra.mxu0 0.0
    %104 = vmatprep.subr.mxu0 0.0
    %105 = vmatpush1.msra.mxu0 0.0
    %106 = vmatprep.subr.mxu0 0.0
    %107 = vmatpush1.msra.mxu0 0.0
    %108 = vmatprep.subr.mxu0 0.0
    %109 = vmatpush1.msra.mxu0 0.0
    %110 = vmatprep.subr.mxu0 0.0
    %111 = vmatpush1.msra.mxu0 0.0
    %112 = vmatprep.subr.mxu0 0.0
    %113 = vmatpush1.msra.mxu0 0.0
    %114 = vmatprep.subr.mxu0 0.0
    %115 = vmatpush1.msra.mxu0 0.0
    %116 = vmatprep.subr.mxu0 0.0
    %117 = vmatpush1.msra.mxu0 0.0
    %118 = vmatprep.subr.mxu0 0.0
    %119 = vmatpush1.msra.mxu0 0.0
    %120 = vmatprep.subr.mxu0 0.0
    %121 = vmatpush1.msra.mxu0 0.0
    %122 = vmatprep.subr.mxu0 0.0
    %123 = vmatpush1.msra.mxu0 0.0
    %124 = vmatprep.subr.mxu0 0.0
    %125 = vmatpush1.msra.mxu0 0.0
    %126 = vmatprep.subr.mxu0 0.0
    %127 = vmatpush1.msra.mxu0 0.0
    %128 = vmatprep.subr.mxu0 0.0
    %129 = vmatpush1.msra.mxu0 0.0
    %130 = vmatprep.subr.mxu0 0.0
    %131 = vmatpush1.msra.mxu0 0.0
    %132 = vmatprep.subr.mxu0 0.0
    %133 = vmatpush1.msra.mxu0 0.0
    %134 = vmatprep.subr.mxu0 0.0
    %135 = vmatpush1.msra.mxu0 0.0
    %136 = vmatprep.subr.mxu0 0.0
    %137 = vmatpush1.msra.mxu0 0.0
    %138 = vmatprep.subr.mxu0 0.0
    %139 = vmatpush1.msra.mxu0 0.0
    %140 = vmatprep.subr.mxu0 0.0
    %141 = vmatpush1.msra.mxu0 0.0
    %142 = vmatprep.mubr.f32.mxu0 0.0
    %143 = vmatmul.mubr.f32.gmra.mrb[0].mxu0 %v55
    %v144 = vpop.f32.mrb[0].mxu0
    %v145 = vadd.f32 0.0, %v144
    %v146 = vpop.f32.mrb[0].mxu0
    %147 = vmatprep.mubr.f32.mxu0 0.0
    %148 = vmatmul.mubr.f32.gmra.mrb[0].mxu0 %v58
    %v149 = vpop.f32.mrb[0].mxu0
    %v150 = vadd.f32 0.0, %v149
    %v151 = vpop.f32.mrb[0].mxu0
    %152 = vmatprep.mubr.f32.mxu0 0.0
    %153 = vmatmul.mubr.f32.gmra.mrb[0].mxu0 %v61
    %v154 = vpop.f32.mrb[0].mxu0
    %v155 = vadd.f32 0.0, %v154
    %v156 = vpop.f32.mrb[0].mxu0
    %157 = vmatprep.mubr.f32.mxu0 0.0
    %158 = vmatmul.mubr.f32.gmra.mrb[0].mxu0 %v64
    %v159 = vpop.f32.mrb[0].mxu0
    %v160 = vadd.f32 0.0, %v159
    %v161 = vpop.f32.mrb[0].mxu0
    %162 = vmatprep.mubr.f32.mxu0 0.0
    %163 = vmatmul.mubr.f32.gmra.mrb[0].mxu0 %v67
    %v164 = vpop.f32.mrb[0].mxu0
    %v165 = vadd.f32 0.0, %v164
    %v166 = vpop.f32.mrb[0].mxu0
    %167 = vmatprep.mubr.f32.mxu0 0.0
    %168 = vmatmul.mubr.f32.gmra.mrb[0].mxu0 %v70
    %v169 = vpop.f32.mrb[0].mxu0
    %v170 = vadd.f32 0.0, %v169
    %v171 = vpop.f32.mrb[0].mxu0
    %172 = vmatprep.mubr.f32.mxu0 0.0
    %173 = vmatmul.mubr.f32.gmra.mrb[0].mxu0 %v73
    %v174 = vpop.f32.mrb[0].mxu0
    %v175 = vadd.f32 0.0, %v174
    %v176 = vpop.f32.mrb[0].mxu0
    %177 = vmatprep.mubr.f32.mxu0 0.0
    %178 = vmatmul.mubr.f32.gmra.mrb[0].mxu0 %v76
    %v179 = vpop.f32.mrb[0].mxu0
    %v180 = vadd.f32 0.0, %v179
    %v181 = vpop.f32.mrb[0].mxu0
    %182 = vdwg.mxu0
    %v184 = vsel %vm53, %v37, 0
    %v187 = vsel %vm53, %v38, 0
    %v190 = vsel %vm53, %v39, 0
    %v193 = vsel %vm53, %v40, 0
    %v196 = vsel %vm53, %v41, 0
    %v199 = vsel %vm53, %v42, 0
    %v202 = vsel %vm53, %v43, 0
    %v205 = vsel %vm53, %v44, 0
    %207 = vmatprep.subr.mxu0 0.0
    %208 = vmatpush1.msra.mxu0 %v31
    %209 = vmatprep.subr.mxu0 0.0
    %210 = vmatpush1.msra.mxu0 0.0
    %211 = vmatprep.subr.mxu0 0.0
    %212 = vmatpush1.msra.mxu0 0.0
    %213 = vmatprep.subr.mxu0 0.0
    %214 = vmatpush1.msra.mxu0 0.0
    %215 = vmatprep.subr.mxu0 0.0
    %216 = vmatpush1.msra.mxu0 0.0
    %217 = vmatprep.subr.mxu0 0.0
    %218 = vmatpush1.msra.mxu0 0.0
    %219 = vmatprep.subr.mxu0 0.0
    %220 = vmatpush1.msra.mxu0 0.0
    %221 = vmatprep.subr.mxu0 0.0
    %222 = vmatpush1.msra.mxu0 0.0
    %223 = vmatprep.subr.mxu0 0.0
    %224 = vmatpush1.msra.mxu0 0.0
    %225 = vmatprep.subr.mxu0 0.0
    %226 = vmatpush1.msra.mxu0 0.0
    %227 = vmatprep.subr.mxu0 0.0
    %228 = vmatpush1.msra.mxu0 0.0
    %229 = vmatprep.subr.mxu0 0.0
    %230 = vmatpush1.msra.mxu0 0.0
    %231 = vmatprep.subr.mxu0 0.0
    %232 = vmatpush1.msra.mxu0 0.0
    %233 = vmatprep.subr.mxu0 0.0
    %234 = vmatpush1.msra.mxu0 0.0
    %235 = vmatprep.subr.mxu0 0.0
    %236 = vmatpush1.msra.mxu0 0.0
    %237 = vmatprep.subr.mxu0 0.0
    %238 = vmatpush1.msra.mxu0 0.0
    %239 = vmatprep.subr.mxu0 0.0
    %240 = vmatpush1.msra.mxu0 0.0
    %241 = vmatprep.subr.mxu0 0.0
    %242 = vmatpush1.msra.mxu0 0.0
    %243 = vmatprep.subr.mxu0 0.0
    %244 = vmatpush1.msra.mxu0 0.0
    %245 = vmatprep.subr.mxu0 0.0
    %246 = vmatpush1.msra.mxu0 0.0
    %247 = vmatprep.subr.mxu0 0.0
    %248 = vmatpush1.msra.mxu0 0.0
    %249 = vmatprep.subr.mxu0 0.0
    %250 = vmatpush1.msra.mxu0 0.0
    %251 = vmatprep.subr.mxu0 0.0
    %252 = vmatpush1.msra.mxu0 0.0
    %253 = vmatprep.subr.mxu0 0.0
    %254 = vmatpush1.msra.mxu0 0.0
    %255 = vmatprep.subr.mxu0 0.0
    %256 = vmatpush1.msra.mxu0 0.0
    %257 = vmatprep.subr.mxu0 0.0
    %258 = vmatpush1.msra.mxu0 0.0
    %259 = vmatprep.subr.mxu0 0.0
    %260 = vmatpush1.msra.mxu0 0.0
    %261 = vmatprep.subr.mxu0 0.0
    %262 = vmatpush1.msra.mxu0 0.0
    %263 = vmatprep.subr.mxu0 0.0
    %264 = vmatpush1.msra.mxu0 0.0
    %265 = vmatprep.subr.mxu0 0.0
    %266 = vmatpush1.msra.mxu0 0.0
    %267 = vmatprep.subr.mxu0 0.0
    %268 = vmatpush1.msra.mxu0 0.0
    %269 = vmatprep.subr.mxu0 0.0
    %270 = vmatpush1.msra.mxu0 0.0
    %271 = vmatprep.mubr.f32.mxu0 0.0
    %272 = vmatmul.mubr.f32.gmra.mrb[0].mxu0 %v184
    %v273 = vpop.f32.mrb[0].mxu0
    %v274 = vadd.f32 %v145, %v273
    %v275 = vpop.f32.mrb[0].mxu0
    %276 = vmatprep.mubr.f32.mxu0 0.0
    %277 = vmatmul.mubr.f32.gmra.mrb[0].mxu0 %v187
    %v278 = vpop.f32.mrb[0].mxu0
    %v279 = vadd.f32 %v150, %v278
    %v280 = vpop.f32.mrb[0].mxu0
    %281 = vmatprep.mubr.f32.mxu0 0.0
    %282 = vmatmul.mubr.f32.gmra.mrb[0].mxu0 %v190
    %v283 = vpop.f32.mrb[0].mxu0
    %v284 = vadd.f32 %v155, %v283
    %v285 = vpop.f32.mrb[0].mxu0
    %286 = vmatprep.mubr.f32.mxu0 0.0
    %287 = vmatmul.mubr.f32.gmra.mrb[0].mxu0 %v193
    %v288 = vpop.f32.mrb[0].mxu0
    %v289 = vadd.f32 %v160, %v288
    %v290 = vpop.f32.mrb[0].mxu0
    %291 = vmatprep.mubr.f32.mxu0 0.0
    %292 = vmatmul.mubr.f32.gmra.mrb[0].mxu0 %v196
    %v293 = vpop.f32.mrb[0].mxu0
    %v294 = vadd.f32 %v165, %v293
    %v295 = vpop.f32.mrb[0].mxu0
    %296 = vmatprep.mubr.f32.mxu0 0.0
    %297 = vmatmul.mubr.f32.gmra.mrb[0].mxu0 %v199
    %v298 = vpop.f32.mrb[0].mxu0
    %v299 = vadd.f32 %v170, %v298
    %v300 = vpop.f32.mrb[0].mxu0
    %301 = vmatprep.mubr.f32.mxu0 0.0
    %302 = vmatmul.mubr.f32.gmra.mrb[0].mxu0 %v202
    %v303 = vpop.f32.mrb[0].mxu0
    %v304 = vadd.f32 %v175, %v303
    %v305 = vpop.f32.mrb[0].mxu0
    %306 = vmatprep.mubr.f32.mxu0 0.0
    %307 = vmatmul.mubr.f32.gmra.mrb[0].mxu0 %v205
    %v308 = vpop.f32.mrb[0].mxu0
    %v309 = vadd.f32 %v180, %v308
    %v310 = vpop.f32.mrb[0].mxu0
    %311 = vdwg.mxu0
    %v312 = vld [vmem:[%s4] sm:$0xff]
    %v313 = vld [vmem:[%s4 + $0x8] sm:$0xff]
    %v314 = vld [vmem:[%s4 + $0x10] sm:$0xff]
    %v315 = vld [vmem:[%s4 + $0x18] sm:$0xff]
    %v316 = vld [vmem:[%s4 + $0x20] sm:$0xff]
    %v317 = vld [vmem:[%s4 + $0x28] sm:$0xff]
    %v318 = vld [vmem:[%s4 + $0x30] sm:$0xff]
    %v319 = vld [vmem:[%s4 + $0x38] sm:$0xff]
    %v320 = vadd.f32 %v274, %v312
    %v321 = vadd.f32 %v279, %v313
    %v322 = vadd.f32 %v284, %v314
    %v323 = vadd.f32 %v289, %v315
    %v324 = vadd.f32 %v294, %v316
    %v325 = vadd.f32 %v299, %v317
    %v326 = vadd.f32 %v304, %v318
    %v327 = vadd.f32 %v309, %v319
    %v328 = vmax.f32 %v320, 0.0
    %v329 = vmax.f32 %v321, 0.0
    %v330 = vmax.f32 %v322, 0.0
    %v331 = vmax.f32 %v323, 0.0
    %v332 = vmax.f32 %v324, 0.0
    %v333 = vmax.f32 %v325, 0.0
    %v334 = vmax.f32 %v326, 0.0
    %v335 = vmax.f32 %v327, 0.0
    %v336 = vld [vmem:[%s5] sm:$0xff]
    %vm337 = vcmask 523264
    %v339 = vsel %vm337, %v336, 0
    %341 = vmatprep.subr.mxu0 0.0
    %342 = vmatpush1.msra.mxu0 %v328
    %343 = vmatprep.subr.mxu0 0.0
    %344 = vmatpush1.msra.mxu0 %v329
    %345 = vmatprep.subr.mxu0 0.0
    %346 = vmatpush1.msra.mxu0 %v330
    %347 = vmatprep.subr.mxu0 0.0
    %348 = vmatpush1.msra.mxu0 %v331
    %349 = vmatprep.subr.mxu0 0.0
    %350 = vmatpush1.msra.mxu0 %v332
    %351 = vmatprep.subr.mxu0 0.0
    %352 = vmatpush1.msra.mxu0 %v333
    %353 = vmatprep.subr.mxu0 0.0
    %354 = vmatpush1.msra.mxu0 %v334
    %355 = vmatprep.subr.mxu0 0.0
    %356 = vmatpush1.msra.mxu0 %v335
    %357 = vmatprep.subr.mxu0 0.0
    %358 = vmatpush1.msra.mxu0 0.0
    %359 = vmatprep.subr.mxu0 0.0
    %360 = vmatpush1.msra.mxu0 0.0
    %361 = vmatprep.subr.mxu0 0.0
    %362 = vmatpush1.msra.mxu0 0.0
    %363 = vmatprep.subr.mxu0 0.0
    %364 = vmatpush1.msra.mxu0 0.0
    %365 = vmatprep.subr.mxu0 0.0
    %366 = vmatpush1.msra.mxu0 0.0
    %367 = vmatprep.subr.mxu0 0.0
    %368 = vmatpush1.msra.mxu0 0.0
    %369 = vmatprep.subr.mxu0 0.0
    %370 = vmatpush1.msra.mxu0 0.0
    %371 = vmatprep.subr.mxu0 0.0
    %372 = vmatpush1.msra.mxu0 0.0
    %373 = vmatprep.subr.mxu0 0.0
    %374 = vmatpush1.msra.mxu0 0.0
    %375 = vmatprep.subr.mxu0 0.0
    %376 = vmatpush1.msra.mxu0 0.0
    %377 = vmatprep.subr.mxu0 0.0
    %378 = vmatpush1.msra.mxu0 0.0
    %379 = vmatprep.subr.mxu0 0.0
    %380 = vmatpush1.msra.mxu0 0.0
    %381 = vmatprep.subr.mxu0 0.0
    %382 = vmatpush1.msra.mxu0 0.0
    %383 = vmatprep.subr.mxu0 0.0
    %384 = vmatpush1.msra.mxu0 0.0
    %385 = vmatprep.subr.mxu0 0.0
    %386 = vmatpush1.msra.mxu0 0.0
    %387 = vmatprep.subr.mxu0 0.0
    %388 = vmatpush1.msra.mxu0 0.0
    %389 = vmatprep.subr.mxu0 0.0
    %390 = vmatpush1.msra.mxu0 0.0
    %391 = vmatprep.subr.mxu0 0.0
    %392 = vmatpush1.msra.mxu0 0.0
    %393 = vmatprep.subr.mxu0 0.0
    %394 = vmatpush1.msra.mxu0 0.0
    %395 = vmatprep.subr.mxu0 0.0
    %396 = vmatpush1.msra.mxu0 0.0
    %397 = vmatprep.subr.mxu0 0.0
    %398 = vmatpush1.msra.mxu0 0.0
    %399 = vmatprep.subr.mxu0 0.0
    %400 = vmatpush1.msra.mxu0 0.0
    %401 = vmatprep.subr.mxu0 0.0
    %402 = vmatpush1.msra.mxu0 0.0
    %403 = vmatprep.subr.mxu0 0.0
    %404 = vmatpush1.msra.mxu0 0.0
    %405 = vmatprep.mubr.f32.mxu0 0.0
    %406 = vmatmul.mubr.f32.gmra.mrb[0].mxu0 %v339
    %v407 = vpop.f32.mrb[0].mxu0
    %v408 = vadd.f32 0.0, %v407
    %v409 = vpop.f32.mrb[0].mxu0
    %410 = vdwg.mxu0
    %v411 = vld [vmem:[%s6] sm:$0xff]
    %v413 = vsel %vm337, %v411, 0
    %415 = vmatprep.subr.mxu0 0.0
    %416 = vmatpush1.msra.mxu0 %v328
    %417 = vmatprep.subr.mxu0 0.0
    %418 = vmatpush1.msra.mxu0 %v329
    %419 = vmatprep.subr.mxu0 0.0
    %420 = vmatpush1.msra.mxu0 %v330
    %421 = vmatprep.subr.mxu0 0.0
    %422 = vmatpush1.msra.mxu0 %v331
    %423 = vmatprep.subr.mxu0 0.0
    %424 = vmatpush1.msra.mxu0 %v332
    %425 = vmatprep.subr.mxu0 0.0
    %426 = vmatpush1.msra.mxu0 %v333
    %427 = vmatprep.subr.mxu0 0.0
    %428 = vmatpush1.msra.mxu0 %v334
    %429 = vmatprep.subr.mxu0 0.0
    %430 = vmatpush1.msra.mxu0 %v335
    %431 = vmatprep.subr.mxu0 0.0
    %432 = vmatpush1.msra.mxu0 0.0
    %433 = vmatprep.subr.mxu0 0.0
    %434 = vmatpush1.msra.mxu0 0.0
    %435 = vmatprep.subr.mxu0 0.0
    %436 = vmatpush1.msra.mxu0 0.0
    %437 = vmatprep.subr.mxu0 0.0
    %438 = vmatpush1.msra.mxu0 0.0
    %439 = vmatprep.subr.mxu0 0.0
    %440 = vmatpush1.msra.mxu0 0.0
    %441 = vmatprep.subr.mxu0 0.0
    %442 = vmatpush1.msra.mxu0 0.0
    %443 = vmatprep.subr.mxu0 0.0
    %444 = vmatpush1.msra.mxu0 0.0
    %445 = vmatprep.subr.mxu0 0.0
    %446 = vmatpush1.msra.mxu0 0.0
    %447 = vmatprep.subr.mxu0 0.0
    %448 = vmatpush1.msra.mxu0 0.0
    %449 = vmatprep.subr.mxu0 0.0
    %450 = vmatpush1.msra.mxu0 0.0
    %451 = vmatprep.subr.mxu0 0.0
    %452 = vmatpush1.msra.mxu0 0.0
    %453 = vmatprep.subr.mxu0 0.0
    %454 = vmatpush1.msra.mxu0 0.0
    %455 = vmatprep.subr.mxu0 0.0
    %456 = vmatpush1.msra.mxu0 0.0
    %457 = vmatprep.subr.mxu0 0.0
    %458 = vmatpush1.msra.mxu0 0.0
    %459 = vmatprep.subr.mxu0 0.0
    %460 = vmatpush1.msra.mxu0 0.0
    %461 = vmatprep.subr.mxu0 0.0
    %462 = vmatpush1.msra.mxu0 0.0
    %463 = vmatprep.subr.mxu0 0.0
    %464 = vmatpush1.msra.mxu0 0.0
    %465 = vmatprep.subr.mxu0 0.0
    %466 = vmatpush1.msra.mxu0 0.0
    %467 = vmatprep.subr.mxu0 0.0
    %468 = vmatpush1.msra.mxu0 0.0
    %469 = vmatprep.subr.mxu0 0.0
    %470 = vmatpush1.msra.mxu0 0.0
    %471 = vmatprep.subr.mxu0 0.0
    %472 = vmatpush1.msra.mxu0 0.0
    %473 = vmatprep.subr.mxu0 0.0
    %474 = vmatpush1.msra.mxu0 0.0
    %475 = vmatprep.subr.mxu0 0.0
    %476 = vmatpush1.msra.mxu0 0.0
    %477 = vmatprep.subr.mxu0 0.0
    %478 = vmatpush1.msra.mxu0 0.0
    %479 = vmatprep.mubr.f32.mxu0 0.0
    %480 = vmatmul.mubr.f32.gmra.mrb[0].mxu0 %v413
    %v481 = vpop.f32.mrb[0].mxu0
    %v482 = vadd.f32 0.0, %v481
    %v483 = vpop.f32.mrb[0].mxu0
    %484 = vdwg.mxu0
    %v485 = vmax.f32 %v408, %v482
    %v486 = vsub.f32 %v408, %v485
    %v487 = vmul.f32 %v486, 1.442695
    %v488 = vpow.pop %v487
    %v489 = vsub.f32 %v482, %v485
    %v490 = vmul.f32 %v489, 1.442695
    %v491 = vpow.pop %v490
    %v492 = vadd.f32 %v488, %v491
    %v493 = vrcp.pop %v492
    %v494 = vmul.f32 1.0, %v493
    %v495 = vmul.f32 %v488, %v494
    %v496 = vmul.f32 %v491, %v494
    %498 = vset.pattern.permute.xlu0 0
    %499 = vperm.xlu0 %498, %v495
    %v500 = vpop.permute.xlu0 %499
    %v502 = vmul.f32 %v27, %v500
    %v503 = vmul.f32 %v28, %v500
    %505 = vset.pattern.permute.xlu0 0
    %506 = vperm.xlu0 %505, %v496
    %v507 = vpop.permute.xlu0 %506
    %v509 = vmul.f32 %v32, %v507
    %v510 = vmul.f32 %v33, %v507
    %v511 = vadd.f32 %v502, %v509
    %v512 = vadd.f32 %v503, %v510
    %513 = vst [vmem:[#allocation2] sm:$0xff] %v511
    %514 = vst [vmem:[#allocation2 + $0x8] sm:$0xff] %v512
    // Predicated region
    $region30: #{tpu_custom_call.1} parent=1 // pred_check
      _
    $region31: #{tpu_custom_call.1} parent=1 // pred_check_branch
      %516 = sbr.rel (0) target = $region33
    $region32: #{tpu_custom_call.1} parent=1 // pred_region
      %s518 = ssub.s32 256, 256
      %519 = vsyncadd [#allocation3], %s518
      %s521 = sshll.u32 [#allocation2], 4
      %s522 = int_to_ptr.vmem [resolvable:$true] %s521
      %524 = dma.vmem_to_hbm [thread:$0]  %s522, 256, %s7, [#allocation3]
    $region33: #{tpu_custom_call.1} parent=1 // pred_fallthru
      _
    // Predicated region
    $region34: #{tpu_custom_call.1} parent=1 // pred_check
      _
    $region35: #{tpu_custom_call.1} parent=1 // pred_check_branch
      %526 = sbr.rel (0) target = $region37
    $region36: #{tpu_custom_call.1} parent=1 // pred_region
      %527 = dma.done [#allocation3], 256
    $region37: #{tpu_custom_call.1} parent=1 // pred_fallthru
      _
    %528 = vsyncpa [#allocation3], 1

</llo_original>
